<compile_context>
chip_gen: v7x
topology: tpu7x:2x2x1
jax: 0.10.0
libtpu: 0.0.40
codegen_flags: <defaults>
</compile_context>

<pallas_src>
import functools

import jax
import jax.numpy as jnp
from jax import lax
from jax.experimental import pallas as pl
from jax.experimental.pallas import tpu as pltpu

BN_EPS = 1e-5
LANE_TILE = 128


def _bn_relu(z, gamma, beta):
    """Train-mode BatchNorm1d (biased batch stats) + affine + ReLU, all in f32.

    One-pass stats with gamma/beta folded into a single per-feature
    scale/shift: only one (B, T) multiply and one (B, T) add on the VPU.
    """
    mean = jnp.mean(z, axis=0, keepdims=True)           # (1, T)
    mean_sq = jnp.mean(z * z, axis=0, keepdims=True)    # (1, T)
    var = mean_sq - mean * mean
    scale = gamma * lax.rsqrt(var + BN_EPS)              # gamma / sqrt(var+eps)
    shift = beta - mean * scale
    return jnp.maximum(z * scale + shift, 0.0)


def _ctgan_residual_tiled_kernel(x_ref, wt_ref, xcol_ref, p_ref, o_ref, *, n_o):
    # x:    (B, I)  full, grid-resident
    # wt:   (I, T)  weight tile, lane-dense in O (clamped index map for copy steps)
    # xcol: (B, T)  x column tile (used only by the concat-copy steps)
    # p:    (2, T)  [gamma; beta] tile
    # o:    (B, T)  one lane-aligned column tile of the fused (B, O+I) output
    j = pl.program_id(0)

    @pl.when(j < n_o)
    def _():
        # Linear tile: (B, I) @ (I, T) on the MXU with f32 accumulation.
        z = jnp.dot(x_ref[...], wt_ref[...], preferred_element_type=jnp.float32)
        y = _bn_relu(z, p_ref[0:1, :], p_ref[1:2, :])
        o_ref[...] = y.astype(o_ref.dtype)

    @pl.when(j >= n_o)
    def _():
        # Fused concat: copy the matching x column tile, written exactly once.
        o_ref[...] = xcol_ref[...].astype(o_ref.dtype)


def _ctgan_residual_single_kernel(x_ref, wt_ref, p_ref, o_ref, *, out_features):
    # Fallback for shapes where O or I is not a multiple of 128.
    O = out_features
    x = x_ref[...]
    z = jnp.dot(x, wt_ref[...], preferred_element_type=jnp.float32)
    y = _bn_relu(z, p_ref[0:1, :], p_ref[1:2, :])
    o_ref[:, :O] = y.astype(o_ref.dtype)
    o_ref[:, O:] = x.astype(o_ref.dtype)


def pack_weight(weight):
    """One-time host-side transpose of PyTorch-layout (O, I) -> (I, O)."""
    return jnp.asarray(weight).T


def pack_bn_params(gamma, beta):
    """Pack BatchNorm affine params once at setup into a single (2, O) array."""
    return jnp.stack([gamma, beta], axis=0)


def ctgan_residual(x, weight_t, gamma_beta, *, tile=LANE_TILE):
    """Forward pass of CTGANResidual (bn=True, training mode).

    x:          (B, I) activations
    weight_t:   (I, O) pre-transposed nn.Linear weight (see pack_weight)
    gamma_beta: (2, O) packed BatchNorm1d [gamma; beta] (see pack_bn_params)

    The Linear bias is intentionally not an input: under train-mode BatchNorm
    it has exactly zero effect on the output.
    Returns (B, O + I) = concat([relu(bn(linear(x))), x], axis=1).
    """
    B, I = x.shape
    Iw, O = weight_t.shape
    assert Iw == I, (Iw, I)

    cost = pl.CostEstimate(
        flops=2 * B * I * O,
        transcendentals=0,
        bytes_accessed=4 * (B * I + I * O + 2 * O + B * (O + I)),
    )

    if O % tile == 0 and I % tile == 0:
        n_o = O // tile
        n_i = I // tile
        kernel = functools.partial(_ctgan_residual_tiled_kernel, n_o=n_o)
        return pl.pallas_call(
            kernel,
            out_shape=jax.ShapeDtypeStruct((B, O + I), x.dtype),
            grid=(n_o + n_i,),
            in_specs=[
                # x, full and grid-resident (constant block index)
                pl.BlockSpec((B, I), lambda j: (0, 0)),
                # weight tile, lane-dense in O; clamped so concat steps re-use
                # the last compute tile (no extra DMA)
                pl.BlockSpec((I, tile), lambda j: (0, jnp.minimum(j, n_o - 1))),
                # x column tile for the fused-concat copy steps
                pl.BlockSpec((B, tile), lambda j: (0, jnp.maximum(j - n_o, 0))),
                # packed [gamma; beta] tile
                pl.BlockSpec((2, tile), lambda j: (0, jnp.minimum(j, n_o - 1))),
            ],
            out_specs=pl.BlockSpec((B, tile), lambda j: (0, j)),
            compiler_params=pltpu.CompilerParams(
                dimension_semantics=("parallel",),
                vmem_limit_bytes=32 * 1024 * 1024,
            ),
            cost_estimate=cost,
        )(x, weight_t, x, gamma_beta)

    # TODO(synk): pad O/I up to 128 multiples instead of this single-block
    # fallback if non-aligned feature sizes ever matter for performance.
    kernel = functools.partial(_ctgan_residual_single_kernel, out_features=O)
    return pl.pallas_call(
        kernel,
        out_shape=jax.ShapeDtypeStruct((B, O + I), x.dtype),
        in_specs=[
            pl.BlockSpec((B, I), lambda: (0, 0)),
            pl.BlockSpec((I, O), lambda: (0, 0)),
            pl.BlockSpec((2, O), lambda: (0, 0)),
        ],
        out_specs=pl.BlockSpec((B, O + I), lambda: (0, 0)),
        cost_estimate=cost,
    )(x, weight_t, gamma_beta)


def _reference(x, weight, bias, gamma, beta):
    # Follows the PyTorch module exactly (INCLUDING the Linear bias) — this
    # also verifies numerically that dropping the bias in the kernel is exact
    # under train-mode BatchNorm.
    z = x @ weight.T + bias
    mean = z.mean(axis=0, keepdims=True)
    var = ((z - mean) ** 2).mean(axis=0, keepdims=True)
    y = jnp.maximum((z - mean) / jnp.sqrt(var + BN_EPS) * gamma + beta, 0.0)
    return jnp.concatenate([y, x], axis=1)


def _run_case(key, B, I, O):
    k_x, k_w, k_b, k_g, k_be = jax.random.split(key, 5)
    x = jax.random.normal(k_x, (B, I), dtype=jnp.float32)

    # PyTorch-like nn.Linear init: U(-1/sqrt(I), 1/sqrt(I))
    bound = 1.0 / (I ** 0.5)
    weight = jax.random.uniform(k_w, (O, I), minval=-bound, maxval=bound,
                                dtype=jnp.float32)
    bias = jax.random.uniform(k_b, (O,), minval=-bound, maxval=bound,
                              dtype=jnp.float32)
    # Non-trivial affine params to exercise the folded scale/shift path.
    gamma = 1.0 + 0.1 * jax.random.normal(k_g, (O,), dtype=jnp.float32)
    beta = 0.1 * jax.random.normal(k_be, (O,), dtype=jnp.float32)

    weight_t = pack_weight(weight)          # once at module setup
    gamma_beta = pack_bn_params(gamma, beta)  # once at module setup

    out = ctgan_residual(x, weight_t, gamma_beta)
    jax.block_until_ready(out)

    ref = _reference(x, weight, bias, gamma, beta)
    assert out.shape == (B, O + I), out.shape
    err = float(jnp.max(jnp.abs(out - ref)))
    assert jnp.allclose(out, ref, atol=2e-4, rtol=2e-4), f"max abs err {err}"


if __name__ == "__main__":
    key = jax.random.PRNGKey(0)
    k0, k1 = jax.random.split(key)

    # Lane-aligned shapes -> feature-tiled parallel grid path.
    _run_case(k0, B=16, I=128, O=256)
    # Small / non-aligned shapes -> single-block fallback path.
    _run_case(k1, B=8, I=32, O=64)

    print("KERNEL_OK")
</pallas_src>

<mosaic_0001>
module attributes {stable_mosaic.version = 11 : i64} {
  func.func @_ctgan_residual_tiled_kernel(%arg0: i32, %arg1: memref<16x128xf32, #tpu.memory_space<vmem>>, %arg2: memref<128x128xf32, #tpu.memory_space<vmem>>, %arg3: memref<16x128xf32, #tpu.memory_space<vmem>>, %arg4: memref<2x128xf32, #tpu.memory_space<vmem>>, %arg5: memref<16x128xf32, #tpu.memory_space<vmem>>) attributes {dimension_semantics = [#tpu.dimension_semantics<parallel>], iteration_bounds = array<i64: 3>, scalar_prefetch = 0 : i64, scratch_operands = 0 : i64, tpu.core_type = #tpu.core_type<tc>, window_params = [{pipeline_mode = #tpu.pipeline_mode<synchronous>, transform_indices = @transform_0, window_bounds = array<i64: 16, 128>}, {transform_indices = @transform_1, window_bounds = array<i64: 128, 128>}, {transform_indices = @transform_2, window_bounds = array<i64: 16, 128>}, {transform_indices = @transform_3, window_bounds = array<i64: 2, 128>}, {transform_indices = @transform_4, window_bounds = array<i64: 16, 128>}]} {
    %c2_i32 = arith.constant 2 : i32
    %0 = arith.cmpi slt, %arg0, %c2_i32 : i32
    %1 = arith.extui %0 : i1 to i32
    %c0_i32 = arith.constant 0 : i32
    %2 = arith.cmpi ne, %1, %c0_i32 : i32
    scf.if %2 {
      %c0 = arith.constant 0 : index
      %c0_2 = arith.constant 0 : index
      %6 = vector.load %arg1[%c0, %c0_2] : memref<16x128xf32, #tpu.memory_space<vmem>>, vector<16x128xf32>
      %c0_3 = arith.constant 0 : index
      %c0_4 = arith.constant 0 : index
      %7 = vector.load %arg2[%c0_3, %c0_4] : memref<128x128xf32, #tpu.memory_space<vmem>>, vector<128x128xf32>
      %cst = arith.constant dense<0.000000e+00> : vector<16x128xf32>
      %8 = tpu.matmul %6, %7, %cst {dimension_numbers = #tpu.dot_dimension_numbers<[1], [0], [0], [1], [0, 0, 1, 1], [], []>} : vector<16x128xf32>, vector<128x128xf32>, vector<16x128xf32> -> vector<16x128xf32>
      %c0_5 = arith.constant 0 : index
      %c0_6 = arith.constant 0 : index
      %9 = vector.load %arg4[%c0_5, %c0_6] : memref<2x128xf32, #tpu.memory_space<vmem>>, vector<1x128xf32>
      %c1 = arith.constant 1 : index
      %c0_7 = arith.constant 0 : index
      %10 = vector.load %arg4[%c1, %c0_7] : memref<2x128xf32, #tpu.memory_space<vmem>>, vector<1x128xf32>
      %cst_8 = arith.constant dense<0.000000e+00> : vector<128xf32>
      %11 = vector.multi_reduction <add>, %8, %cst_8 [0] : vector<16x128xf32> to vector<128xf32>
      %12 = vector.shape_cast %11 : vector<128xf32> to vector<1x128xf32>
      %cst_9 = arith.constant 1.600000e+01 : f32
      %13 = vector.broadcast %cst_9 : f32 to vector<1x128xf32>
      %14 = arith.divf %12, %13 : vector<1x128xf32>
      %15 = arith.mulf %8, %8 : vector<16x128xf32>
      %cst_10 = arith.constant dense<0.000000e+00> : vector<128xf32>
      %16 = vector.multi_reduction <add>, %15, %cst_10 [0] : vector<16x128xf32> to vector<128xf32>
      %17 = vector.shape_cast %16 : vector<128xf32> to vector<1x128xf32>
      %cst_11 = arith.constant 1.600000e+01 : f32
      %18 = vector.broadcast %cst_11 : f32 to vector<1x128xf32>
      %19 = arith.divf %17, %18 : vector<1x128xf32>
      %20 = arith.mulf %14, %14 : vector<1x128xf32>
      %21 = arith.subf %19, %20 : vector<1x128xf32>
      %cst_12 = arith.constant 9.99999974E-6 : f32
      %22 = vector.broadcast %cst_12 : f32 to vector<1x128xf32>
      %23 = arith.addf %21, %22 : vector<1x128xf32>
      %24 = math.rsqrt %23 : vector<1x128xf32>
      %25 = arith.mulf %9, %24 : vector<1x128xf32>
      %26 = arith.mulf %14, %25 : vector<1x128xf32>
      %27 = arith.subf %10, %26 : vector<1x128xf32>
      %28 = vector.broadcast %25 : vector<1x128xf32> to vector<16x128xf32>
      %29 = arith.mulf %8, %28 : vector<16x128xf32>
      %30 = vector.broadcast %27 : vector<1x128xf32> to vector<16x128xf32>
      %31 = arith.addf %29, %30 : vector<16x128xf32>
      %cst_13 = arith.constant 0.000000e+00 : f32
      %32 = vector.broadcast %cst_13 : f32 to vector<16x128xf32>
      %33 = arith.maximumf %31, %32 : vector<16x128xf32>
      %c0_14 = arith.constant 0 : index
      %c0_15 = arith.constant 0 : index
      %34 = vector.load %arg5[%c0_14, %c0_15] : memref<16x128xf32, #tpu.memory_space<vmem>>, vector<16x128xf32>
      tpu.vector_store %arg5[%c0_14, %c0_15], %33 {strides = array<i32>} : memref<16x128xf32, #tpu.memory_space<vmem>>, vector<16x128xf32>,
    } else {
    }
    %c2_i32_0 = arith.constant 2 : i32
    %3 = arith.cmpi sge, %arg0, %c2_i32_0 : i32
    %4 = arith.extui %3 : i1 to i32
    %c0_i32_1 = arith.constant 0 : i32
    %5 = arith.cmpi ne, %4, %c0_i32_1 : i32
    scf.if %5 {
      %c0 = arith.constant 0 : index
      %c0_2 = arith.constant 0 : index
      %6 = vector.load %arg3[%c0, %c0_2] : memref<16x128xf32, #tpu.memory_space<vmem>>, vector<16x128xf32>
      %c0_3 = arith.constant 0 : index
      %c0_4 = arith.constant 0 : index
      %7 = vector.load %arg5[%c0_3, %c0_4] : memref<16x128xf32, #tpu.memory_space<vmem>>, vector<16x128xf32>
      tpu.vector_store %arg5[%c0_3, %c0_4], %6 {strides = array<i32>} : memref<16x128xf32, #tpu.memory_space<vmem>>, vector<16x128xf32>,
    } else {
    }
    return
  }
  func.func @transform_0(%arg0: i32) -> (i32, i32) {
    %c0_i32 = arith.constant 0 : i32
    %c0_i32_0 = arith.constant 0 : i32
    %c0_i32_1 = arith.constant 0 : i32
    return %c0_i32, %c0_i32_0 : i32, i32
  }
  func.func @transform_1(%arg0: i32) -> (i32, i32) {
    %c1_i32 = arith.constant 1 : i32
    %0 = arith.minsi %arg0, %c1_i32 : i32
    %c0_i32 = arith.constant 0 : i32
    %c0_i32_0 = arith.constant 0 : i32
    return %c0_i32, %0 : i32, i32
  }
  func.func @transform_2(%arg0: i32) -> (i32, i32) {
    %c2_i32 = arith.constant 2 : i32
    %0 = arith.subi %arg0, %c2_i32 : i32
    %c0_i32 = arith.constant 0 : i32
    %1 = arith.maxsi %0, %c0_i32 : i32
    %c0_i32_0 = arith.constant 0 : i32
    %c0_i32_1 = arith.constant 0 : i32
    return %c0_i32_0, %1 : i32, i32
  }
  func.func @transform_3(%arg0: i32) -> (i32, i32) {
    %c1_i32 = arith.constant 1 : i32
    %0 = arith.minsi %arg0, %c1_i32 : i32
    %c0_i32 = arith.constant 0 : i32
    %c0_i32_0 = arith.constant 0 : i32
    return %c0_i32, %0 : i32, i32
  }
  func.func @transform_4(%arg0: i32) -> (i32, i32) {
    %c0_i32 = arith.constant 0 : i32
    %c0_i32_0 = arith.constant 0 : i32
    return %c0_i32, %arg0 : i32, i32
  }
}

</mosaic_0001>

<llo_original>
// kernel: tpu_custom_call.1
$region0: #{tpu_custom_call.1}
  #allocation0 [shape = 'u32[]', space=smem, size = 0x4, offset = 0x4, fixed_abs, tag = 'smem constant byte address 0x4 - core index']
  #allocation1 [shape = 'u32[144,128]{1,0:T(1,128)}', space=vmem, size = 0x12000, scoped, tag = 'internal scratch']
  %s0 = inlined_call_operand.hbm [shape: f32[16,128], index: 0, kind: input, shape index: {}]
  %s1 = inlined_call_operand.hbm [shape: f32[128,256], index: 1, kind: input, shape index: {}]
  %s2 = inlined_call_operand.hbm [shape: f32[16,128], index: 2, kind: input, shape index: {}]
  %s3 = inlined_call_operand.vmem [shape: f32[2,256], index: 3, kind: input, shape index: {}]
  %s4 = inlined_call_operand.hbm [shape: f32[16,384], index: 4, kind: output, shape index: {}]
  %s5 = sld [smem:[#allocation0]]
  $region69: #{tpu_custom_call.1} parent=0
    _
  %s7 = ssub.s32 1, %s5
  %s8 = scalar_select 0, %s7, %s5
  $region1: #{tpu_custom_call.1} parent=0
    #allocation2 [shape = 'u8[8192]{0}', space=vmem, size = 0x2000, scoped, tag = 'input window, operand 0, single buffered']
    #allocation3 [shape = 's32[2]{0}', space=sflag, size = 0x8, scoped, tag = 'scoped memory for tpu_custom_call.1']
    #allocation4 [shape = 's32[2]{0}', space=sflag, size = 0x8, scoped, tag = 'scoped memory for tpu_custom_call.1']
    #allocation5 [shape = 'u8[131072]{0}', space=vmem, size = 0x20000, scoped, tag = 'input window, operand 1']
    #allocation6 [shape = 's32[2]{0}', space=sflag, size = 0x8, scoped, tag = 'scoped memory for tpu_custom_call.1']
    #allocation7 [shape = 'u8[16384]{0}', space=vmem, size = 0x4000, scoped, tag = 'input window, operand 2']
    #allocation8 [shape = 'u8[16384]{0}', space=vmem, size = 0x4000, scoped, tag = 'output window, operand 0']
    %9 = vsyncpa [#allocation3], 0
    %10 = vsyncpa [#allocation6], 0
    %s11 = scalar_lea.sflag [#allocation6], 1
    %12 = vsyncpa %s11, 0
    %13 = vsyncpa [#allocation4], 0
    %s14 = scalar_lea.sflag [#allocation4], 1
    %15 = vsyncpa %s14, 0
    loop: start=0, step=1, limit=5
    $region2: #{tpu_custom_call.1} parent=1 // loop_pre_header
      _
    $region3: #{tpu_custom_call.1} parent=1 // loop_header
      %s17 = sphi 0, %s21
      %p18 = scmp.ge.s32.totalorder %s17, 5
      %s25 = sphi 0, %s25
      %s27 = sphi 0, %s25
      %s28 = sphi 0, %s27
      %s42 = sphi 0, %s28
      %s52 = sphi 0, %s54
      %s55 = sphi 0, %s52
      %s56 = sphi 0, %s55
      %s72 = sphi 0, %s56
      %s84 = sphi 0, %s86
      %s87 = sphi 0, %s84
      %s88 = sphi 0, %s87
      %s104 = sphi 0, %s88
      %s114 = sphi 0, %s116
      %s117 = sphi 0, %s114
      %s118 = sphi 0, %s117
      %s134 = sphi 0, %s118
      %s140 = sphi 0, %s142
      %s143 = sphi 0, %s140
      %s144 = sphi 0, %s143
      %s160 = sphi 0, %s144
    $region4: #{tpu_custom_call.1} parent=1 // loop_header_branch
      %20 = sbr.rel (%p18) target = $region8
    $region5: #{tpu_custom_call.1} parent=1 // loop_body
      %s22 = ssub.s32 %s17, 1
      %s23 = ssub.s32 %s17, 2
      %s24 = sadd.s32 %s17, 1
      %s26 = sadd.s32 %s25, 1
      %p29 = scmp.eq.s32.totalorder %s17, 2
      %p30 = scmp.ne.s32.totalorder %s25, %s27
      %p31 = scmp.eq.s32.totalorder %s17, 0
      %p32 = por %p30, %p31
      %p33 = scmp.ne.s32.totalorder %s25, %s27
      %p34 = scmp.eq.s32.totalorder %s22, 2
      %p35 = por %p33, %p34
      %p36 = scmp.ne.s32.totalorder %s27, %s28
      %p37 = scmp.eq.s32.totalorder %s22, 0
      %p38 = por %p36, %p37
      %p39 = scmp.ne.s32.totalorder %s27, %s28
      %p40 = scmp.eq.s32.totalorder %s23, 2
      %p41 = por %p39, %p40
      %p43 = scmp.ne.s32.totalorder %s28, %s42
      %p44 = scmp.eq.s32.totalorder %s23, 0
      %p45 = por %p43, %p44
      %p46 = scmp.lt.s32.totalorder %s17, 1
      %s47 = scalar_select %p46, %s17, 1
      %p48 = scmp.lt.s32.totalorder %s24, 1
      %s49 = scalar_select %p48, %s24, 1
      %s50 = ssub.s32 %s47, %s49
      %p51 = scmp.eq.s32.totalorder %s50, 0
      %s53 = sadd.s32 %s52, 1
      %s54 = scalar_select %p51, %s52, %s53
      %p57 = pneg %p51
      %p58 = scmp.eq.s32.totalorder %s17, 2
      %p59 = por %p57, %p58
      %p60 = scmp.ne.s32.totalorder %s52, %s55
      %p61 = scmp.eq.s32.totalorder %s17, 0
      %p62 = por %p60, %p61
      %p63 = scmp.ne.s32.totalorder %s52, %s55
      %p64 = scmp.eq.s32.totalorder %s22, 2
      %p65 = por %p63, %p64
      %p66 = scmp.ne.s32.totalorder %s55, %s56
      %p67 = scmp.eq.s32.totalorder %s22, 0
      %p68 = por %p66, %p67
      %p69 = scmp.ne.s32.totalorder %s55, %s56
      %p70 = scmp.eq.s32.totalorder %s23, 2
      %p71 = por %p69, %p70
      %p73 = scmp.ne.s32.totalorder %s56, %s72
      %p74 = scmp.eq.s32.totalorder %s23, 0
      %p75 = por %p73, %p74
      %s76 = ssub.s32 %s17, 2
      %p77 = scmp.gt.s32.totalorder %s76, 0
      %s78 = scalar_select %p77, %s76, 0
      %s79 = ssub.s32 %s24, 2
      %p80 = scmp.gt.s32.totalorder %s79, 0
      %s81 = scalar_select %p80, %s79, 0
      %s82 = ssub.s32 %s78, %s81
      %p83 = scmp.eq.s32.totalorder %s82, 0
      %s85 = sadd.s32 %s84, 1
      %s86 = scalar_select %p83, %s84, %s85
      %p89 = pneg %p83
      %p90 = scmp.eq.s32.totalorder %s17, 2
      %p91 = por %p89, %p90
      %p92 = scmp.ne.s32.totalorder %s84, %s87
      %p93 = scmp.eq.s32.totalorder %s17, 0
      %p94 = por %p92, %p93
      %p95 = scmp.ne.s32.totalorder %s84, %s87
      %p96 = scmp.eq.s32.totalorder %s22, 2
      %p97 = por %p95, %p96
      %p98 = scmp.ne.s32.totalorder %s87, %s88
      %p99 = scmp.eq.s32.totalorder %s22, 0
      %p100 = por %p98, %p99
      %p101 = scmp.ne.s32.totalorder %s87, %s88
      %p102 = scmp.eq.s32.totalorder %s23, 2
      %p103 = por %p101, %p102
      %p105 = scmp.ne.s32.totalorder %s88, %s104
      %p106 = scmp.eq.s32.totalorder %s23, 0
      %p107 = por %p105, %p106
      %p108 = scmp.lt.s32.totalorder %s17, 1
      %s109 = scalar_select %p108, %s17, 1
      %p110 = scmp.lt.s32.totalorder %s24, 1
      %s111 = scalar_select %p110, %s24, 1
      %s112 = ssub.s32 %s109, %s111
      %p113 = scmp.eq.s32.totalorder %s112, 0
      %s115 = sadd.s32 %s114, 1
      %s116 = scalar_select %p113, %s114, %s115
      %p119 = pneg %p113
      %p120 = scmp.eq.s32.totalorder %s17, 2
      %p121 = por %p119, %p120
      %p122 = scmp.ne.s32.totalorder %s114, %s117
      %p123 = scmp.eq.s32.totalorder %s17, 0
      %p124 = por %p122, %p123
      %p125 = scmp.ne.s32.totalorder %s114, %s117
      %p126 = scmp.eq.s32.totalorder %s22, 2
      %p127 = por %p125, %p126
      %p128 = scmp.ne.s32.totalorder %s117, %s118
      %p129 = scmp.eq.s32.totalorder %s22, 0
      %p130 = por %p128, %p129
      %p131 = scmp.ne.s32.totalorder %s117, %s118
      %p132 = scmp.eq.s32.totalorder %s23, 2
      %p133 = por %p131, %p132
      %p135 = scmp.ne.s32.totalorder %s118, %s134
      %p136 = scmp.eq.s32.totalorder %s23, 0
      %p137 = por %p135, %p136
      %s138 = ssub.s32 %s17, %s24
      %p139 = scmp.eq.s32.totalorder %s138, 0
      %s141 = sadd.s32 %s140, 1
      %s142 = scalar_select %p139, %s140, %s141
      %p145 = pneg %p139
      %p146 = scmp.eq.s32.totalorder %s17, 2
      %p147 = por %p145, %p146
      %p148 = scmp.ne.s32.totalorder %s140, %s143
      %p149 = scmp.eq.s32.totalorder %s17, 0
      %p150 = por %p148, %p149
      %p151 = scmp.ne.s32.totalorder %s140, %s143
      %p152 = scmp.eq.s32.totalorder %s22, 2
      %p153 = por %p151, %p152
      %p154 = scmp.ne.s32.totalorder %s143, %s144
      %p155 = scmp.eq.s32.totalorder %s22, 0
      %p156 = por %p154, %p155
      %p157 = scmp.ne.s32.totalorder %s143, %s144
      %p158 = scmp.eq.s32.totalorder %s23, 2
      %p159 = por %p157, %p158
      %p161 = scmp.ne.s32.totalorder %s144, %s160
      %p162 = scmp.eq.s32.totalorder %s23, 0
      %p163 = por %p161, %p162
      %p164 = scmp.le.s32.totalorder 1, %s17
      %p165 = scmp.lt.s32.totalorder %s17, 4
      %p166 = pnand %p164, %p165
      %p167 = pneg %p166
      // Predicated region
      $region9: #{tpu_custom_call.1} parent=5 // pred_check
        _
      $region10: #{tpu_custom_call.1} parent=5 // pred_check_branch
        %169 = sbr.rel (%p166) target = $region12
      $region11: #{tpu_custom_call.1} parent=5 // pred_region
        %s170 = ssub.s32 %s17, 1
        // Predicated region
        $region13: #{tpu_custom_call.1} parent=11 // pred_check
          %p171 = pneg %p38
        $region14: #{tpu_custom_call.1} parent=11 // pred_check_branch
          %173 = sbr.rel (%p171) target = $region16
        $region15: #{tpu_custom_call.1} parent=11 // pred_region
          %s175 = ssub.s32 256, 256
          %176 = vsyncadd [#allocation3], %s175
          %s177 = sshll.u32 [#allocation2], 4
          %s178 = int_to_ptr.vmem [resolvable:$true] %s177
          %183 = dma.hbm_to_vmem [thread:$0]  %s0, 256, %s178, [#allocation3], 128, 128, 8
        $region16: #{tpu_custom_call.1} parent=11 // pred_fallthru
          _
      $region12: #{tpu_custom_call.1} parent=5 // pred_fallthru
        _
      %p184 = scmp.lt.s32.totalorder %s17, 3
      // Predicated region
      $region17: #{tpu_custom_call.1} parent=5 // pred_check
        %p185 = pneg %p184
      $region18: #{tpu_custom_call.1} parent=5 // pred_check_branch
        %187 = sbr.rel (%p185) target = $region20
      $region19: #{tpu_custom_call.1} parent=5 // pred_region
        // Predicated region
        $region21: #{tpu_custom_call.1} parent=19 // pred_check
          %p188 = pneg %p62
        $region22: #{tpu_custom_call.1} parent=19 // pred_check_branch
          %190 = sbr.rel (%p188) target = $region24
        $region23: #{tpu_custom_call.1} parent=19 // pred_region
          %s191 = sand.u32 %s17, 1
          %s192 = scalar_lea.sflag [#allocation6], %s191
          %s193 = sand.u32 %s52, 1
          %s194 = smul.addr %s193, 128
          %s195 = scalar_lea.vmem [#allocation5], %s194
          %p196 = scmp.lt.s32.totalorder %s17, 1
          %s197 = scalar_select %p196, %s17, 1
          %s199 = ssub.s32 2048, 2048
          %200 = vsyncadd %s192, %s199
          %s201 = smul.addr %s197, 128
          %s202 = scalar_lea.hbm %s1, %s201
          %s203 = sshll.u32 %s195, 4
          %s204 = int_to_ptr.vmem [resolvable:$true] %s203
          %209 = dma.hbm_to_vmem [thread:$0]  %s202, 2048, %s204, %s192, 256, 128, 8
        $region24: #{tpu_custom_call.1} parent=19 // pred_fallthru
          _
        // Predicated region
        $region25: #{tpu_custom_call.1} parent=19 // pred_check
          %p210 = pneg %p94
        $region26: #{tpu_custom_call.1} parent=19 // pred_check_branch
          %212 = sbr.rel (%p210) target = $region28
        $region27: #{tpu_custom_call.1} parent=19 // pred_region
          %s213 = sand.u32 %s17, 1
          %s214 = scalar_lea.sflag [#allocation6], %s213
          %s215 = sand.u32 %s84, 1
          %s216 = smul.addr %s215, 16
          %s217 = scalar_lea.vmem [#allocation7], %s216
          %s218 = ssub.s32 %s17, 2
          %p219 = scmp.gt.s32.totalorder %s218, 0
          %s220 = scalar_select %p219, %s218, 0
          %s222 = ssub.s32 256, 256
          %223 = vsyncadd %s214, %s222
          %s224 = smul.addr %s220, 128
          %s225 = scalar_lea.hbm %s2, %s224
          %s226 = sshll.u32 %s217, 4
          %s227 = int_to_ptr.vmem [resolvable:$true] %s226
          %232 = dma.hbm_to_vmem [thread:$0]  %s225, 256, %s227, %s214, 128, 128, 8
        $region28: #{tpu_custom_call.1} parent=19 // pred_fallthru
          _
        // Predicated region
        $region29: #{tpu_custom_call.1} parent=19 // pred_check
          %p233 = pneg %p124
        $region30: #{tpu_custom_call.1} parent=19 // pred_check_branch
          %235 = sbr.rel (%p233) target = $region32
        $region31: #{tpu_custom_call.1} parent=19 // pred_region
          %p236 = scmp.lt.s32.totalorder %s17, 1
          %s237 = scalar_select %p236, %s17, 1
          %p238 = scmp.lt.s32.totalorder %s237, 1
          %s239 = scalar_select %p238, %s237, 1
          %s240 = smul.addr %s239, 2
          %s241 = scalar_lea.vmem %s3, %s240
          %p242 = scmp.lt.s32.totalorder %s17, 1
          %s243 = scalar_select %p242, %s17, 1
        $region32: #{tpu_custom_call.1} parent=19 // pred_fallthru
          _
      $region20: #{tpu_custom_call.1} parent=5 // pred_fallthru
        _
      %p244 = scmp.le.s32.totalorder 1, %s17
      %p245 = scmp.lt.s32.totalorder %s17, 4
      %p246 = pnand %p244, %p245
      %p247 = pneg %p246
      // Predicated region
      $region33: #{tpu_custom_call.1} parent=5 // pred_check
        _
      $region34: #{tpu_custom_call.1} parent=5 // pred_check_branch
        %249 = sbr.rel (%p246) target = $region36
      $region35: #{tpu_custom_call.1} parent=5 // pred_region
        %s250 = ssub.s32 %s17, 1
        // Predicated region
        $region37: #{tpu_custom_call.1} parent=35 // pred_check
          %p251 = pneg %p38
        $region38: #{tpu_custom_call.1} parent=35 // pred_check_branch
          %253 = sbr.rel (%p251) target = $region40
        $region39: #{tpu_custom_call.1} parent=35 // pred_region
          %254 = dma.done [#allocation3], 256
        $region40: #{tpu_custom_call.1} parent=35 // pred_fallthru
          _
        %s255 = sand.u32 %s22, 1
        %s256 = scalar_lea.sflag [#allocation6], %s255
        %s257 = sand.u32 %s55, 1
        %s258 = smul.addr %s257, 128
        %s259 = scalar_lea.vmem [#allocation5], %s258
        // Predicated region
        $region41: #{tpu_custom_call.1} parent=35 // pred_check
          %p260 = pneg %p68
        $region42: #{tpu_custom_call.1} parent=35 // pred_check_branch
          %262 = sbr.rel (%p260) target = $region44
        $region43: #{tpu_custom_call.1} parent=35 // pred_region
          %263 = dma.done %s256, 2048
        $region44: #{tpu_custom_call.1} parent=35 // pred_fallthru
          _
        %s264 = sand.u32 %s22, 1
        %s265 = scalar_lea.sflag [#allocation6], %s264
        %s266 = sand.u32 %s87, 1
        %s267 = smul.addr %s266, 16
        %s268 = scalar_lea.vmem [#allocation7], %s267
        // Predicated region
        $region45: #{tpu_custom_call.1} parent=35 // pred_check
          %p269 = pneg %p100
        $region46: #{tpu_custom_call.1} parent=35 // pred_check_branch
          %271 = sbr.rel (%p269) target = $region48
        $region47: #{tpu_custom_call.1} parent=35 // pred_region
          %272 = dma.done %s265, 256
        $region48: #{tpu_custom_call.1} parent=35 // pred_fallthru
          _
        %p273 = pneg %p38
        %p274 = pneg %p35
        %s275 = sand.u32 %s22, 1
        %s276 = scalar_lea.sflag [#allocation6], %s275
        %s277 = sand.u32 %s55, 1
        %s278 = smul.addr %s277, 128
        %s279 = scalar_lea.vmem [#allocation5], %s278
        %p280 = pneg %p68
        %p281 = pneg %p65
        %s282 = sand.u32 %s22, 1
        %s283 = scalar_lea.sflag [#allocation6], %s282
        %s284 = sand.u32 %s87, 1
        %s285 = smul.addr %s284, 16
        %s286 = scalar_lea.vmem [#allocation7], %s285
        %p287 = pneg %p100
        %p288 = pneg %p97
        %p289 = scmp.lt.s32.totalorder %s22, 1
        %s290 = scalar_select %p289, %s22, 1
        %p291 = scmp.lt.s32.totalorder %s290, 1
        %s292 = scalar_select %p291, %s290, 1
        %s293 = smul.addr %s292, 2
        %s294 = scalar_lea.vmem %s3, %s293
        %p295 = pneg %p130
        %p296 = pneg %p127
        %p297 = pneg %p156
        %p298 = pneg %p153
        %s299 = sand.u32 %s143, 1
        %s300 = scalar_lea.sflag [#allocation4], %s299
        %s301 = sand.u32 %s143, 1
        %s302 = smul.addr %s301, 16
        %s303 = scalar_lea.vmem [#allocation8], %s302
        %p304 = scmp.lt.s32.totalorder %s22, 1
        %s305 = scalar_select %p304, %s22, 1
        %s306 = ssub.s32 %s22, 2
        %p307 = scmp.gt.s32.totalorder %s306, 0
        %s308 = scalar_select %p307, %s306, 0
        %p309 = scmp.lt.s32.totalorder %s22, 1
        %s310 = scalar_select %p309, %s22, 1
        %p311 = scmp.lt.s32.totalorder %s310, 1
        %s312 = scalar_select %p311, %s310, 1
        %s313 = smul.addr %s312, 2
        %s314 = scalar_lea.vmem %s3, %s313
        %p315 = scmp.lt.s32.totalorder %s22, 1
        %s316 = scalar_select %p315, %s22, 1
        %p317 = scmp.lt.s32.totalorder %s22, 2
        // Predicated region
        $region49: #{tpu_custom_call.1} parent=35 // pred_check
          %p318 = pneg %p317
        $region50: #{tpu_custom_call.1} parent=35 // pred_check_branch
          %320 = sbr.rel (%p318) target = $region52
        $region51: #{tpu_custom_call.1} parent=35 // pred_region
          %v321 = vld [vmem:[#allocation2] sm:$0xff]
          %v322 = vld [vmem:[#allocation2 + $0x8] sm:$0xff]
          %v323 = vld [vmem:[%s259] sm:$0xff]
          %v324 = vld [vmem:[%s259 + $0x8] sm:$0xff]
          %v325 = vld [vmem:[%s259 + $0x10] sm:$0xff]
          %v326 = vld [vmem:[%s259 + $0x18] sm:$0xff]
          %v327 = vld [vmem:[%s259 + $0x20] sm:$0xff]
          %v328 = vld [vmem:[%s259 + $0x28] sm:$0xff]
          %v329 = vld [vmem:[%s259 + $0x30] sm:$0xff]
          %v330 = vld [vmem:[%s259 + $0x38] sm:$0xff]
          %v331 = vld [vmem:[%s259 + $0x40] sm:$0xff]
          %v332 = vld [vmem:[%s259 + $0x48] sm:$0xff]
          %v333 = vld [vmem:[%s259 + $0x50] sm:$0xff]
          %v334 = vld [vmem:[%s259 + $0x58] sm:$0xff]
          %v335 = vld [vmem:[%s259 + $0x60] sm:$0xff]
          %v336 = vld [vmem:[%s259 + $0x68] sm:$0xff]
          %v337 = vld [vmem:[%s259 + $0x70] sm:$0xff]
          %v338 = vld [vmem:[%s259 + $0x78] sm:$0xff]
          %339 = vmatprep.subr.mxu0 0.0
          %340 = vmatpush1.msra.mxu0 %v323
          %341 = vmatprep.subr.mxu0 0.0
          %342 = vmatpush1.msra.mxu0 %v324
          %343 = vmatprep.subr.mxu0 0.0
          %344 = vmatpush1.msra.mxu0 %v325
          %345 = vmatprep.subr.mxu0 0.0
          %346 = vmatpush1.msra.mxu0 %v326
          %347 = vmatprep.subr.mxu0 0.0
          %348 = vmatpush1.msra.mxu0 %v327
          %349 = vmatprep.subr.mxu0 0.0
          %350 = vmatpush1.msra.mxu0 %v328
          %351 = vmatprep.subr.mxu0 0.0
          %352 = vmatpush1.msra.mxu0 %v329
          %353 = vmatprep.subr.mxu0 0.0
          %354 = vmatpush1.msra.mxu0 %v330
          %355 = vmatprep.subr.mxu0 0.0
          %356 = vmatpush1.msra.mxu0 %v331
          %357 = vmatprep.subr.mxu0 0.0
          %358 = vmatpush1.msra.mxu0 %v332
          %359 = vmatprep.subr.mxu0 0.0
          %360 = vmatpush1.msra.mxu0 %v333
          %361 = vmatprep.subr.mxu0 0.0
          %362 = vmatpush1.msra.mxu0 %v334
          %363 = vmatprep.subr.mxu0 0.0
          %364 = vmatpush1.msra.mxu0 %v335
          %365 = vmatprep.subr.mxu0 0.0
          %366 = vmatpush1.msra.mxu0 %v336
          %367 = vmatprep.subr.mxu0 0.0
          %368 = vmatpush1.msra.mxu0 %v337
          %369 = vmatprep.subr.mxu0 0.0
          %370 = vmatpush1.msra.mxu0 %v338
          %371 = vmatprep.subr.mxu0 0.0
          %372 = vmatpush1.msra.mxu0 0.0
          %373 = vmatprep.subr.mxu0 0.0
          %374 = vmatpush1.msra.mxu0 0.0
          %375 = vmatprep.subr.mxu0 0.0
          %376 = vmatpush1.msra.mxu0 0.0
          %377 = vmatprep.subr.mxu0 0.0
          %378 = vmatpush1.msra.mxu0 0.0
          %379 = vmatprep.subr.mxu0 0.0
          %380 = vmatpush1.msra.mxu0 0.0
          %381 = vmatprep.subr.mxu0 0.0
          %382 = vmatpush1.msra.mxu0 0.0
          %383 = vmatprep.subr.mxu0 0.0
          %384 = vmatpush1.msra.mxu0 0.0
          %385 = vmatprep.subr.mxu0 0.0
          %386 = vmatpush1.msra.mxu0 0.0
          %387 = vmatprep.subr.mxu0 0.0
          %388 = vmatpush1.msra.mxu0 0.0
          %389 = vmatprep.subr.mxu0 0.0
          %390 = vmatpush1.msra.mxu0 0.0
          %391 = vmatprep.subr.mxu0 0.0
          %392 = vmatpush1.msra.mxu0 0.0
          %393 = vmatprep.subr.mxu0 0.0
          %394 = vmatpush1.msra.mxu0 0.0
          %395 = vmatprep.subr.mxu0 0.0
          %396 = vmatpush1.msra.mxu0 0.0
          %397 = vmatprep.subr.mxu0 0.0
          %398 = vmatpush1.msra.mxu0 0.0
          %399 = vmatprep.subr.mxu0 0.0
          %400 = vmatpush1.msra.mxu0 0.0
          %401 = vmatprep.subr.mxu0 0.0
          %402 = vmatpush1.msra.mxu0 0.0
          %403 = vmatprep.mubr.f32.mxu0 0.0
          %404 = vmatmul.mubr.f32.gmra.mrb[0].mxu0 %v321
          %v405 = vpop.f32.mrb[0].mxu0
          %v406 = vadd.f32 0.0, %v405
          %v407 = vpop.f32.mrb[0].mxu0
          %408 = vmatprep.mubr.f32.mxu0 0.0
          %409 = vmatmul.mubr.f32.gmra.mrb[0].mxu0 %v322
          %v410 = vpop.f32.mrb[0].mxu0
          %v411 = vadd.f32 0.0, %v410
          %v412 = vpop.f32.mrb[0].mxu0
          %413 = vdwg.mxu0
          %v414 = vld [vmem:[%s314] sm:$0x1]
          %v415 = vld [vmem:[%s314 + $0x1] sm:$0x1]
          %v416 = vadd.f32 %v406, %v411
          %v417 = vrot.slane %v416, 4
          %v418 = vadd.f32 %v416, %v417
          %v419 = vrot.slane %v418, 2
          %v420 = vadd.f32 %v418, %v419
          %v421 = vrot.slane %v420, 1
          %v422 = vadd.f32 %v420, %v421
          %v423 = vrcp.pop 16.0
          %v424 = vmul.f32 %v422, %v423
          %v425 = vmul.f32 %v406, %v406
          %v426 = vmul.f32 %v411, %v411
          %v427 = vadd.f32 %v425, %v426
          %v428 = vrot.slane %v427, 4
          %v429 = vadd.f32 %v427, %v428
          %v430 = vrot.slane %v429, 2
          %v431 = vadd.f32 %v429, %v430
          %v432 = vrot.slane %v431, 1
          %v433 = vadd.f32 %v431, %v432
          %v434 = vmul.f32 %v433, %v423
          %v435 = vmul.f32 %v424, %v424
          %v436 = vsub.f32 %v434, %v435
          %v437 = vadd.f32 %v436, 1e-05
          %v438 = vrsqrt.pop %v437
          %v439 = vmul.f32 %v414, %v438
          %v440 = vmul.f32 %v424, %v439
          %v441 = vsub.f32 %v415, %v440
          %v442 = vlaneseq
          %v443 = vshrl.u32 %v442, 7
          %v444 = vsub.s32 0, %v443
          %v445 = vrot.slane %v439, %v444
          %v446 = vmul.f32 %v406, %v445
          %v447 = vmul.f32 %v411, %v445
          %v448 = vlaneseq
          %v449 = vshrl.u32 %v448, 7
          %v450 = vsub.s32 0, %v449
          %v451 = vrot.slane %v441, %v450
          %v452 = vadd.f32 %v446, %v451
          %v453 = vadd.f32 %v447, %v451
          %v454 = vmax.f32 %v452, 0.0
          %v455 = vmax.f32 %v453, 0.0
          %456 = vst [vmem:[%s303] sm:$0xff] %v454
          %457 = vst [vmem:[%s303 + $0x8] sm:$0xff] %v455
        $region52: #{tpu_custom_call.1} parent=35 // pred_fallthru
          _
        %p458 = scmp.ge.s32.totalorder %s22, 2
        // Predicated region
        $region53: #{tpu_custom_call.1} parent=35 // pred_check
          %p459 = pneg %p458
        $region54: #{tpu_custom_call.1} parent=35 // pred_check_branch
          %461 = sbr.rel (%p459) target = $region56
        $region55: #{tpu_custom_call.1} parent=35 // pred_region
          %v462 = vld [vmem:[%s268] sm:$0xff]
          %v463 = vld [vmem:[%s268 + $0x8] sm:$0xff]
          %464 = vst [vmem:[%s303] sm:$0xff] %v462
          %465 = vst [vmem:[%s303 + $0x8] sm:$0xff] %v463
        $region56: #{tpu_custom_call.1} parent=35 // pred_fallthru
          _
        %s466 = sand.u32 %s143, 1
        %s467 = scalar_lea.sflag [#allocation4], %s466
        %s468 = sand.u32 %s143, 1
        %s469 = smul.addr %s468, 16
        %s470 = scalar_lea.vmem [#allocation8], %s469
        // Predicated region
        $region57: #{tpu_custom_call.1} parent=35 // pred_check
          %p471 = pneg %p153
        $region58: #{tpu_custom_call.1} parent=35 // pred_check_branch
          %473 = sbr.rel (%p471) target = $region60
        $region59: #{tpu_custom_call.1} parent=35 // pred_region
          %s475 = ssub.s32 256, 256
          %476 = vsyncadd %s467, %s475
          %s477 = smul.addr %s22, 128
          %s478 = scalar_lea.hbm %s4, %s477
          %s479 = sshll.u32 %s470, 4
          %s480 = int_to_ptr.vmem [resolvable:$true] %s479
          %485 = dma.vmem_to_hbm [thread:$0]  %s480, 256, %s478, %s467, 128, 384, 8
        $region60: #{tpu_custom_call.1} parent=35 // pred_fallthru
          _
      $region36: #{tpu_custom_call.1} parent=5 // pred_fallthru
        _
      %p486 = scmp.le.s32.totalorder 2, %s17
      // Predicated region
      $region61: #{tpu_custom_call.1} parent=5 // pred_check
        %p487 = pneg %p486
      $region62: #{tpu_custom_call.1} parent=5 // pred_check_branch
        %489 = sbr.rel (%p487) target = $region64
      $region63: #{tpu_custom_call.1} parent=5 // pred_region
        %s490 = ssub.s32 %s17, 2
        // Predicated region
        $region65: #{tpu_custom_call.1} parent=63 // pred_check
          %p491 = pneg %p159
        $region66: #{tpu_custom_call.1} parent=63 // pred_check_branch
          %493 = sbr.rel (%p491) target = $region68
        $region67: #{tpu_custom_call.1} parent=63 // pred_region
          %s494 = sand.u32 %s144, 1
          %s495 = scalar_lea.sflag [#allocation4], %s494
          %s496 = sand.u32 %s144, 1
          %s497 = smul.addr %s496, 16
          %s498 = scalar_lea.vmem [#allocation8], %s497
          %499 = dma.done %s495, 256
        $region68: #{tpu_custom_call.1} parent=63 // pred_fallthru
          _
      $region64: #{tpu_custom_call.1} parent=5 // pred_fallthru
        _
    $region6: #{tpu_custom_call.1} parent=1 // loop_footer
      %s21 = sadd.s32 1, %s17
    $region7: #{tpu_custom_call.1} parent=1 // loop_footer_branch
      %16 = sbr.rel target = $region3
    $region8: #{tpu_custom_call.1} parent=1 // loop_exit
      _
    %500 = vsyncpa [#allocation3], 1
    %s501 = scalar_lea.sflag [#allocation3], 1
    %502 = vsyncpa %s501, 1
    %503 = vsyncpa [#allocation6], 1
    %s504 = scalar_lea.sflag [#allocation6], 1
    %505 = vsyncpa %s504, 1
    %506 = vsyncpa [#allocation4], 1
    %s507 = scalar_lea.sflag [#allocation4], 1
    %508 = vsyncpa %s507, 1

</llo_original>
